<compile_context>
chip_gen: v7x
topology: tpu7x:2x2x1
jax: 0.10.0
libtpu: 0.0.40
codegen_flags: <defaults>
</compile_context>

<pallas_src>
import functools

import jax
import jax.numpy as jnp
from jax.experimental import pallas as pl
from jax.experimental.pallas import tpu as pltpu


# --------------------------------------------------------------------------
# Kernel
# --------------------------------------------------------------------------
def _mlp_head_kernel(x_ref, w1_ref, b1_ref, w2_ref, b2_ref, o_ref, acc_ref):
    """K-tiled fc1 (f32 accumulate) -> bias+ReLU -> fc2 -> bias+ReLU."""
    kk = pl.program_id(1)

    @pl.when(kk == 0)
    def _():
        acc_ref[...] = jnp.zeros_like(acc_ref)

    # Per-tile cast of the activation to the weight dtype (bf16 recommended):
    # avoids a separate wrapper-side HBM cast pass over all of x.
    x = x_ref[...].astype(w1_ref.dtype)
    acc_ref[...] += jnp.dot(x, w1_ref[...], preferred_element_type=jnp.float32)

    # Finalize once, on the last K step: bias + ReLU + fc2 + bias + ReLU.
    @pl.when(kk == pl.num_programs(1) - 1)
    def _():
        h = jnp.maximum(acc_ref[...] + b1_ref[...], 0.0)
        y = jnp.dot(h.astype(w2_ref.dtype), w2_ref[...],
                    preferred_element_type=jnp.float32) + b2_ref[...]
        o_ref[...] = jnp.maximum(y, 0.0).astype(o_ref.dtype)


# --------------------------------------------------------------------------
# Planning helpers
# --------------------------------------------------------------------------
def _round_up(x, m):
    return (x + m - 1) // m * m


@functools.lru_cache(maxsize=None)
def _vmem_capacity_bytes():
    """Physical VMEM per core: 128 MiB on v5e/v6e, 64 MiB on v7x."""
    try:
        return int(pltpu.get_tpu_info().vmem_capacity_bytes)
    except Exception:
        pass
    try:
        kind = jax.devices()[0].device_kind.lower()
        if "v5" in kind or "v6" in kind:
            return 128 << 20
    except Exception:
        pass
    return 64 << 20  # conservative default (v7x per-TensorCore VMEM)


@functools.lru_cache(maxsize=None)
def _vmem_budget_bytes():
    """Scoped-VMEM budget: ~100 MiB on 128-MiB parts, ~48 MiB on 64-MiB parts,
    always leaving headroom for compiler-internal scratch."""
    cap = _vmem_capacity_bytes()
    return int(min(0.78 * cap, cap - (16 << 20)))


@functools.lru_cache(maxsize=None)
def _pipeline_mode_supported():
    """Feature-detect BlockSpec(pipeline_mode=pl.Buffered(...)) once."""
    try:
        pl.BlockSpec((8, 128), lambda i: (i, 0), pipeline_mode=pl.Buffered(1))
        return True
    except (TypeError, AttributeError):
        return False


def _plan_tiles(n, k, hidden, block_n, in_bpe, w_bpe, out_bpe,
                vmem_budget, k_block_target, single_buffer_weights):
    """Pick (block_n, tk, padded_k, vmem_need).

    Prefer a fully-resident W1 (tk = K, DMA'd once); stream W1 in lane-aligned
    K chunks only when it cannot fit the scoped-VMEM budget."""
    # Multiple of 16 (bf16 sublane packing) and never larger than needed.
    block_n = max(16, min(block_n, _round_up(n, 16)))
    wgt_bufs = 1 if single_buffer_weights else 2

    def footprint(tk, w1_bufs):
        return (2 * block_n * tk * in_bpe             # x tiles (double-buffered)
                + w1_bufs * tk * hidden * w_bpe       # W1
                + wgt_bufs * hidden * hidden * w_bpe  # W2
                + wgt_bufs * 2 * hidden * 4           # biases (f32)
                + 2 * block_n * hidden * out_bpe      # out tiles
                + block_n * hidden * 4)               # f32 accumulator scratch

    resident_allowed = (k_block_target is None or k <= k_block_target)
    if resident_allowed and footprint(k, wgt_bufs) <= vmem_budget:
        return block_n, k, k, footprint(k, wgt_bufs)

    # Streaming path: tk a multiple of 256 where possible (matches the
    # 256-deep MXU contraction on v6e/v7x).  K is zero-padded up to a multiple
    # of tk in the wrapper; zero x columns / zero W1 rows add nothing.
    cap = k if k_block_target is None else max(min(k_block_target, k), 128)
    tk = 128
    for cand in (4096, 2048, 1024, 512, 256, 128):
        if cand <= cap and footprint(cand, 2) <= vmem_budget:
            tk = cand
            break
    padded_k = _round_up(k, tk)
    return block_n, tk, padded_k, footprint(tk, 2)


# --------------------------------------------------------------------------
# Forward pass
# --------------------------------------------------------------------------
@functools.partial(
    jax.jit,
    static_argnames=("block_n", "k_block_target", "single_buffer_weights"))
def roi_2mlp_head_forward(x_pooled, w1, b1, w2, b2, *, block_n=256,
                          k_block_target=None, single_buffer_weights=True):
    """x_pooled: (N, C, R, R) NCHW ROI features (output of roi_xform).

    Weights are (K_in, K_out), i.e. transposed vs. torch nn.Linear (pass them
    in bf16 for the MXU fast path); biases are (hidden,).  Computes
    relu(relu(x @ W1 + b1) @ W2 + b2) and returns (N, hidden) in x's dtype.
    """
    n, c, r, r2 = x_pooled.shape
    assert r == r2, "expected square ROI features"
    k = c * r * r
    hidden = w2.shape[1]
    out_dtype = x_pooled.dtype

    in_bpe = jnp.dtype(x_pooled.dtype).itemsize
    w_bpe = jnp.dtype(w1.dtype).itemsize
    out_bpe = jnp.dtype(out_dtype).itemsize

    use_buffered = single_buffer_weights and _pipeline_mode_supported()
    vmem_budget = _vmem_budget_bytes()
    block_n, tk, padded_k, vmem_need = _plan_tiles(
        n, k, hidden, block_n, in_bpe, w_bpe, out_bpe,
        vmem_budget, k_block_target, use_buffered)

    # Same flattening as torch .view(N, -1) on NCHW features.
    x_flat = x_pooled.reshape(n, k)

    # Pad K (zero columns / rows contribute nothing to the dot) and N so every
    # grid step works on a full, aligned tile.  No-ops when already aligned.
    padded_n = _round_up(n, block_n)
    if padded_k != k:
        x_flat = jnp.pad(x_flat, ((0, 0), (0, padded_k - k)))
        w1 = jnp.pad(w1, ((0, padded_k - k), (0, 0)))
    if padded_n != n:
        x_flat = jnp.pad(x_flat, ((0, padded_n - n), (0, 0)))

    b1_2d = b1.reshape(1, hidden).astype(jnp.float32)
    b2_2d = b2.reshape(1, hidden).astype(jnp.float32)

    n_blocks = padded_n // block_n
    k_blocks = padded_k // tk

    def _spec(shape, index_map, buffer_count=None):
        if buffer_count is None or not use_buffered:
            return pl.BlockSpec(shape, index_map)
        return pl.BlockSpec(shape, index_map,
                            pipeline_mode=pl.Buffered(buffer_count))

    # Single-buffer operands whose block index never changes; stream W1 with
    # the default double-buffering when the K axis is tiled.
    w1_buf = 1 if k_blocks == 1 else None

    vmem_limit = int(min(max(int(1.25 * vmem_need), 32 << 20),
                         max(vmem_budget, vmem_need)))

    # Real HBM traffic: W1 is re-streamed once per N-block only when K-tiled.
    w1_traffic = (n_blocks if k_blocks > 1 else 1) * padded_k * hidden * w_bpe
    cost = pl.CostEstimate(
        flops=2 * padded_n * (padded_k * hidden + hidden * hidden),
        transcendentals=0,
        bytes_accessed=int(padded_n * padded_k * in_bpe + w1_traffic
                           + hidden * hidden * w_bpe
                           + padded_n * hidden * out_bpe + 2 * hidden * 4),
    )

    out = pl.pallas_call(
        _mlp_head_kernel,
        out_shape=jax.ShapeDtypeStruct((padded_n, hidden), out_dtype),
        grid_spec=pltpu.PrefetchScalarGridSpec(
            num_scalar_prefetch=0,
            grid=(n_blocks, k_blocks),
            in_specs=[
                pl.BlockSpec((block_n, tk), lambda i, kk: (i, kk)),      # x
                _spec((tk, hidden), lambda i, kk: (kk, 0), w1_buf),      # W1
                _spec((1, hidden), lambda i, kk: (0, 0), 1),             # b1
                _spec((hidden, hidden), lambda i, kk: (0, 0), 1),        # W2
                _spec((1, hidden), lambda i, kk: (0, 0), 1),             # b2
            ],
            out_specs=pl.BlockSpec((block_n, hidden), lambda i, kk: (i, 0)),
            scratch_shapes=[pltpu.VMEM((block_n, hidden), jnp.float32)],
        ),
        compiler_params=pltpu.CompilerParams(
            dimension_semantics=("parallel", "arbitrary"),
            vmem_limit_bytes=vmem_limit,
        ),
        cost_estimate=cost,
    )(x_flat, w1, b1_2d, w2, b2_2d)

    return out[:n] if padded_n != n else out


def roi_2mlp_head(x_pooled, w1, b1, w2, b2, **kwargs):
    """Forward wrapper.  Uses single-buffered constant weights when the jax
    build supports pipeline_mode; falls back to default double-buffering only
    for errors specifically about that feature."""
    try:
        return roi_2mlp_head_forward(x_pooled, w1, b1, w2, b2,
                                     single_buffer_weights=True, **kwargs)
    except Exception as e:  # narrow: re-raise anything unrelated
        msg = str(e)
        if not any(s in msg for s in ("pipeline_mode", "Buffered",
                                      "buffer_count")):
            raise
        return roi_2mlp_head_forward(x_pooled, w1, b1, w2, b2,
                                     single_buffer_weights=False, **kwargs)


# --------------------------------------------------------------------------
# Reference + demo
# --------------------------------------------------------------------------
def _xavier_fill(key, fan_in, fan_out, dtype=jnp.float32):
    # Caffe2/Detectron XavierFill: U(-sqrt(3/fan_in), +sqrt(3/fan_in))
    scale = (3.0 / fan_in) ** 0.5
    return jax.random.uniform(key, (fan_in, fan_out), dtype,
                              minval=-scale, maxval=scale)


def _reference(x_pooled, w1, b1, w2, b2):
    """Mixed-precision (bf16 operands, f32 accumulate) pure-JAX reference
    matching the kernel's numerics."""
    xb = x_pooled.reshape(x_pooled.shape[0], -1).astype(jnp.bfloat16)
    h = jnp.maximum(
        jnp.dot(xb, w1.astype(jnp.bfloat16),
                preferred_element_type=jnp.float32) + b1, 0.0)
    return jnp.maximum(
        jnp.dot(h.astype(jnp.bfloat16), w2.astype(jnp.bfloat16),
                preferred_element_type=jnp.float32) + b2, 0.0)


if __name__ == "__main__":
    # Small config consistent with the module: dim_in channels, ROI_XFORM
    # resolution, MLP_HEAD_DIM hidden width, 512 ROIs (=> 2 N-tiles of 256).
    dim_in, roi_size, hidden_dim, num_rois = 4, 8, 128, 512
    k_in = dim_in * roi_size ** 2  # 256

    key = jax.random.PRNGKey(0)
    kx, kw1, kb1, kw2, kb2 = jax.random.split(key, 5)

    # ROI-pooled features (what roi_xform would produce), NCHW, float32.
    x = jax.random.normal(kx, (num_rois, dim_in, roi_size, roi_size),
                          dtype=jnp.float32)

    # XavierFill weights; small non-zero biases so the bias path is exercised
    # (the module inits them to 0).  Weights are carried persistently in bf16.
    w1_f32 = _xavier_fill(kw1, k_in, hidden_dim)           # (K, hidden)
    b1 = 0.1 * jax.random.normal(kb1, (hidden_dim,), jnp.float32)
    w2_f32 = _xavier_fill(kw2, hidden_dim, hidden_dim)     # (hidden, hidden)
    b2 = 0.1 * jax.random.normal(kb2, (hidden_dim,), jnp.float32)
    w1_bf16 = w1_f32.astype(jnp.bfloat16)                  # one-time, persistent
    w2_bf16 = w2_f32.astype(jnp.bfloat16)

    ref = _reference(x, w1_f32, b1, w2_f32, b2)

    # 1) Default path: resident, single-buffered W1 (one K step), 2 N-tiles.
    out = jax.block_until_ready(roi_2mlp_head(x, w1_bf16, b1, w2_bf16, b2))
    assert out.shape == (num_rois, hidden_dim)
    assert jnp.allclose(out, ref, atol=1e-2, rtol=1e-2)

    # 2) Forced K-streaming path: W1 in two K chunks with the f32 VMEM
    #    accumulator (exercises the configuration used when Detectron-scale
    #    K does not fit the per-generation VMEM budget).
    out2 = jax.block_until_ready(
        roi_2mlp_head(x, w1_bf16, b1, w2_bf16, b2, k_block_target=128))
    assert out2.shape == (num_rois, hidden_dim)
    assert jnp.allclose(out2, ref, atol=1e-2, rtol=1e-2)

    print("KERNEL_OK")
</pallas_src>

<mosaic_0001>
module attributes {stable_mosaic.version = 11 : i64} {
  func.func @_mlp_head_kernel(%arg0: i32, %arg1: i32, %arg2: memref<256x256xf32, #tpu.memory_space<vmem>>, %arg3: memref<256x128xbf16, #tpu.memory_space<vmem>>, %arg4: memref<1x128xf32, #tpu.memory_space<vmem>>, %arg5: memref<128x128xbf16, #tpu.memory_space<vmem>>, %arg6: memref<1x128xf32, #tpu.memory_space<vmem>>, %arg7: memref<256x128xf32, #tpu.memory_space<vmem>>, %arg8: memref<256x128xf32, #tpu.memory_space<vmem>>) attributes {dimension_semantics = [#tpu.dimension_semantics<parallel>, #tpu.dimension_semantics<arbitrary>], iteration_bounds = array<i64: 2, 1>, scalar_prefetch = 0 : i64, scratch_operands = 1 : i64, tpu.core_type = #tpu.core_type<tc>, window_params = [{transform_indices = @transform_0, window_bounds = array<i64: 256, 256>}, {pipeline_mode = #tpu.pipeline_mode<synchronous>, transform_indices = @transform_1, window_bounds = array<i64: 256, 128>}, {pipeline_mode = #tpu.pipeline_mode<synchronous>, transform_indices = @transform_2, window_bounds = array<i64: 1, 128>}, {pipeline_mode = #tpu.pipeline_mode<synchronous>, transform_indices = @transform_3, window_bounds = array<i64: 128, 128>}, {pipeline_mode = #tpu.pipeline_mode<synchronous>, transform_indices = @transform_4, window_bounds = array<i64: 1, 128>}, {transform_indices = @transform_5, window_bounds = array<i64: 256, 128>}]} {
    %c0_i32 = arith.constant 0 : i32
    %0 = arith.cmpi eq, %arg1, %c0_i32 : i32
    %1 = arith.extui %0 : i1 to i32
    %c0_i32_0 = arith.constant 0 : i32
    %2 = arith.cmpi ne, %1, %c0_i32_0 : i32
    scf.if %2 {
      %cst_10 = arith.constant 0.000000e+00 : f32
      %13 = vector.broadcast %cst_10 : f32 to vector<256x128xf32>
      %c0_11 = arith.constant 0 : index
      %c0_12 = arith.constant 0 : index
      %14 = vector.load %arg8[%c0_11, %c0_12] : memref<256x128xf32, #tpu.memory_space<vmem>>, vector<256x128xf32>
      tpu.vector_store %arg8[%c0_11, %c0_12], %13 {strides = array<i32>} : memref<256x128xf32, #tpu.memory_space<vmem>>, vector<256x128xf32>,
    } else {
    }
    %c0 = arith.constant 0 : index
    %c0_1 = arith.constant 0 : index
    %3 = vector.load %arg2[%c0, %c0_1] : memref<256x256xf32, #tpu.memory_space<vmem>>, vector<256x256xf32>
    %4 = arith.truncf %3 : vector<256x256xf32> to vector<256x256xbf16>
    %c0_2 = arith.constant 0 : index
    %c0_3 = arith.constant 0 : index
    %5 = vector.load %arg8[%c0_2, %c0_3] : memref<256x128xf32, #tpu.memory_space<vmem>>, vector<256x128xf32>
    %c0_4 = arith.constant 0 : index
    %c0_5 = arith.constant 0 : index
    %6 = vector.load %arg3[%c0_4, %c0_5] : memref<256x128xbf16, #tpu.memory_space<vmem>>, vector<256x128xbf16>
    %cst = arith.constant dense<0.000000e+00> : vector<256x128xf32>
    %7 = tpu.matmul %4, %6, %cst {dimension_numbers = #tpu.dot_dimension_numbers<[1], [0], [0], [1], [0, 0, 1, 1], [], []>} : vector<256x256xbf16>, vector<256x128xbf16>, vector<256x128xf32> -> vector<256x128xf32>
    %8 = arith.addf %5, %7 : vector<256x128xf32>
    %c0_6 = arith.constant 0 : index
    %c0_7 = arith.constant 0 : index
    %9 = vector.load %arg8[%c0_6, %c0_7] : memref<256x128xf32, #tpu.memory_space<vmem>>, vector<256x128xf32>
    tpu.vector_store %arg8[%c0_6, %c0_7], %8 {strides = array<i32>} : memref<256x128xf32, #tpu.memory_space<vmem>>, vector<256x128xf32>,
    %c0_i32_8 = arith.constant 0 : i32
    %10 = arith.cmpi eq, %arg1, %c0_i32_8 : i32
    %11 = arith.extui %10 : i1 to i32
    %c0_i32_9 = arith.constant 0 : i32
    %12 = arith.cmpi ne, %11, %c0_i32_9 : i32
    scf.if %12 {
      %c0_10 = arith.constant 0 : index
      %c0_11 = arith.constant 0 : index
      %13 = vector.load %arg8[%c0_10, %c0_11] : memref<256x128xf32, #tpu.memory_space<vmem>>, vector<256x128xf32>
      %c0_12 = arith.constant 0 : index
      %c0_13 = arith.constant 0 : index
      %14 = vector.load %arg4[%c0_12, %c0_13] : memref<1x128xf32, #tpu.memory_space<vmem>>, vector<1x128xf32>
      %15 = vector.broadcast %14 : vector<1x128xf32> to vector<256x128xf32>
      %16 = arith.addf %13, %15 : vector<256x128xf32>
      %cst_14 = arith.constant 0.000000e+00 : f32
      %17 = vector.broadcast %cst_14 : f32 to vector<256x128xf32>
      %18 = arith.maximumf %16, %17 : vector<256x128xf32>
      %19 = arith.truncf %18 : vector<256x128xf32> to vector<256x128xbf16>
      %c0_15 = arith.constant 0 : index
      %c0_16 = arith.constant 0 : index
      %20 = vector.load %arg5[%c0_15, %c0_16] : memref<128x128xbf16, #tpu.memory_space<vmem>>, vector<128x128xbf16>
      %cst_17 = arith.constant dense<0.000000e+00> : vector<256x128xf32>
      %21 = tpu.matmul %19, %20, %cst_17 {dimension_numbers = #tpu.dot_dimension_numbers<[1], [0], [0], [1], [0, 0, 1, 1], [], []>} : vector<256x128xbf16>, vector<128x128xbf16>, vector<256x128xf32> -> vector<256x128xf32>
      %c0_18 = arith.constant 0 : index
      %c0_19 = arith.constant 0 : index
      %22 = vector.load %arg6[%c0_18, %c0_19] : memref<1x128xf32, #tpu.memory_space<vmem>>, vector<1x128xf32>
      %23 = vector.broadcast %22 : vector<1x128xf32> to vector<256x128xf32>
      %24 = arith.addf %21, %23 : vector<256x128xf32>
      %cst_20 = arith.constant 0.000000e+00 : f32
      %25 = vector.broadcast %cst_20 : f32 to vector<256x128xf32>
      %26 = arith.maximumf %24, %25 : vector<256x128xf32>
      %c0_21 = arith.constant 0 : index
      %c0_22 = arith.constant 0 : index
      %27 = vector.load %arg7[%c0_21, %c0_22] : memref<256x128xf32, #tpu.memory_space<vmem>>, vector<256x128xf32>
      tpu.vector_store %arg7[%c0_21, %c0_22], %26 {strides = array<i32>} : memref<256x128xf32, #tpu.memory_space<vmem>>, vector<256x128xf32>,
    } else {
    }
    return
  }
  func.func @transform_0(%arg0: i32, %arg1: i32) -> (i32, i32) {
    %c0_i32 = arith.constant 0 : i32
    return %arg0, %arg1 : i32, i32
  }
  func.func @transform_1(%arg0: i32, %arg1: i32) -> (i32, i32) {
    %c0_i32 = arith.constant 0 : i32
    %c0_i32_0 = arith.constant 0 : i32
    return %arg1, %c0_i32 : i32, i32
  }
  func.func @transform_2(%arg0: i32, %arg1: i32) -> (i32, i32) {
    %c0_i32 = arith.constant 0 : i32
    %c0_i32_0 = arith.constant 0 : i32
    %c0_i32_1 = arith.constant 0 : i32
    return %c0_i32, %c0_i32_0 : i32, i32
  }
  func.func @transform_3(%arg0: i32, %arg1: i32) -> (i32, i32) {
    %c0_i32 = arith.constant 0 : i32
    %c0_i32_0 = arith.constant 0 : i32
    %c0_i32_1 = arith.constant 0 : i32
    return %c0_i32, %c0_i32_0 : i32, i32
  }
  func.func @transform_4(%arg0: i32, %arg1: i32) -> (i32, i32) {
    %c0_i32 = arith.constant 0 : i32
    %c0_i32_0 = arith.constant 0 : i32
    %c0_i32_1 = arith.constant 0 : i32
    return %c0_i32, %c0_i32_0 : i32, i32
  }
  func.func @transform_5(%arg0: i32, %arg1: i32) -> (i32, i32) {
    %c0_i32 = arith.constant 0 : i32
    %c0_i32_0 = arith.constant 0 : i32
    return %arg0, %c0_i32 : i32, i32
  }
}

</mosaic_0001>

<llo_original>
// kernel: roi_2mlp_head_forward.1
$region0: #{roi_2mlp_head_forward.1}
  #allocation0 [shape = 'u32[]', space=smem, size = 0x4, offset = 0x4, fixed_abs, tag = 'smem constant byte address 0x4 - core index']
  #allocation1 [shape = 'u32[144,128]{1,0:T(1,128)}', space=vmem, size = 0x12000, scoped, tag = 'internal scratch']
  #allocation2 [shape = 'f32[256,128]{1,0:T(8,128)}', space=vmem, size = 0x20000, scoped, tag = 'scratch operand']
  %s0 = inlined_call_operand.vmem [shape: f32[512,256], index: 0, kind: input, shape index: {}]
  %s1 = inlined_call_operand.vmem [shape: bf16[256,128], index: 1, kind: input, shape index: {}]
  %s2 = inlined_call_operand.vmem [shape: f32[1,128], index: 2, kind: input, shape index: {}]
  %s3 = inlined_call_operand.vmem [shape: bf16[128,128], index: 3, kind: input, shape index: {}]
  %s4 = inlined_call_operand.vmem [shape: f32[1,128], index: 4, kind: input, shape index: {}]
  %s5 = inlined_call_operand.hbm [shape: f32[512,128], index: 5, kind: output, shape index: {}]
  %s6 = sld [smem:[#allocation0]]
  $region61: #{roi_2mlp_head_forward.1} parent=0
    _
  %s8 = ssub.s32 1, %s6
  %s9 = scalar_select 0, %s8, %s6
  $region1: #{roi_2mlp_head_forward.1} parent=0
    #allocation3 [shape = 'u8[262144]{0}', space=vmem, size = 0x40000, scoped, tag = 'output window, operand 0']
    #allocation4 [shape = 's32[2]{0}', space=sflag, size = 0x8, scoped, tag = 'scoped memory for roi_2mlp_head_forward.1']
    %10 = vsyncpa [#allocation4], 0
    %s11 = scalar_lea.sflag [#allocation4], 1
    %12 = vsyncpa %s11, 0
    loop: start=0, step=1, limit=4
    $region2: #{roi_2mlp_head_forward.1} parent=1 // loop_pre_header
      _
    $region3: #{roi_2mlp_head_forward.1} parent=1 // loop_header
      %s14 = sphi 0, %s18
      %p15 = scmp.ge.s32.totalorder %s14, 4
      %s21 = sphi 0, %s33
      %s22 = sphi 0, %s29
      %s23 = sphi 0, %s21
      %s24 = sphi 0, %s22
      %s25 = sphi 0, %s23
      %s26 = sphi 0, %s24
      %s38 = sphi 0, %s40
      %s41 = sphi 0, %s38
      %s42 = sphi 0, %s41
      %s58 = sphi 0, %s42
      %s64 = sphi 0, %s66
      %s67 = sphi 0, %s64
      %s68 = sphi 0, %s67
      %s84 = sphi 0, %s68
      %s88 = sphi 0, %s88
      %s90 = sphi 0, %s88
      %s91 = sphi 0, %s90
      %s105 = sphi 0, %s91
      %s109 = sphi 0, %s109
      %s111 = sphi 0, %s109
      %s112 = sphi 0, %s111
      %s126 = sphi 0, %s112
      %s130 = sphi 0, %s130
      %s132 = sphi 0, %s130
      %s133 = sphi 0, %s132
      %s147 = sphi 0, %s133
      %s153 = sphi 0, %s155
      %s156 = sphi 0, %s153
      %s157 = sphi 0, %s156
      %s173 = sphi 0, %s157
    $region4: #{roi_2mlp_head_forward.1} parent=1 // loop_header_branch
      %17 = sbr.rel (%p15) target = $region8
    $region5: #{roi_2mlp_head_forward.1} parent=1 // loop_body
      %s19 = ssub.s32 %s14, 1
      %s20 = ssub.s32 %s14, 2
      %s27 = sadd.s32 1, %s22
      %p28 = scmp.ge.s32.totalorder %s27, 1
      %s29 = scalar_select %p28, 0, %s27
      %s30 = sadd.s32 1, %s21
      %s31 = scalar_select %p28, %s30, %s21
      %p32 = scmp.ge.s32.totalorder %s31, 2
      %s33 = scalar_select %p32, 0, %s31
      %s34 = ssub.s32 %s21, %s33
      %s35 = ssub.s32 %s22, %s29
      %s36 = sor.u32 %s34, %s35
      %p37 = scmp.eq.s32.totalorder %s36, 0
      %s39 = sadd.s32 %s38, 1
      %s40 = scalar_select %p37, %s38, %s39
      %p43 = pneg %p37
      %p44 = scmp.eq.s32.totalorder %s14, 1
      %p45 = por %p43, %p44
      %p46 = scmp.ne.s32.totalorder %s38, %s41
      %p47 = scmp.eq.s32.totalorder %s14, 0
      %p48 = por %p46, %p47
      %p49 = scmp.ne.s32.totalorder %s38, %s41
      %p50 = scmp.eq.s32.totalorder %s19, 1
      %p51 = por %p49, %p50
      %p52 = scmp.ne.s32.totalorder %s41, %s42
      %p53 = scmp.eq.s32.totalorder %s19, 0
      %p54 = por %p52, %p53
      %p55 = scmp.ne.s32.totalorder %s41, %s42
      %p56 = scmp.eq.s32.totalorder %s20, 1
      %p57 = por %p55, %p56
      %p59 = scmp.ne.s32.totalorder %s42, %s58
      %p60 = scmp.eq.s32.totalorder %s20, 0
      %p61 = por %p59, %p60
      %s62 = ssub.s32 %s22, %s29
      %p63 = scmp.eq.s32.totalorder %s62, 0
      %s65 = sadd.s32 %s64, 1
      %s66 = scalar_select %p63, %s64, %s65
      %p69 = pneg %p63
      %p70 = scmp.eq.s32.totalorder %s14, 1
      %p71 = por %p69, %p70
      %p72 = scmp.ne.s32.totalorder %s64, %s67
      %p73 = scmp.eq.s32.totalorder %s14, 0
      %p74 = por %p72, %p73
      %p75 = scmp.ne.s32.totalorder %s64, %s67
      %p76 = scmp.eq.s32.totalorder %s19, 1
      %p77 = por %p75, %p76
      %p78 = scmp.ne.s32.totalorder %s67, %s68
      %p79 = scmp.eq.s32.totalorder %s19, 0
      %p80 = por %p78, %p79
      %p81 = scmp.ne.s32.totalorder %s67, %s68
      %p82 = scmp.eq.s32.totalorder %s20, 1
      %p83 = por %p81, %p82
      %p85 = scmp.ne.s32.totalorder %s68, %s84
      %p86 = scmp.eq.s32.totalorder %s20, 0
      %p87 = por %p85, %p86
      %s89 = sadd.s32 %s88, 1
      %p92 = scmp.eq.s32.totalorder %s14, 1
      %p93 = scmp.ne.s32.totalorder %s88, %s90
      %p94 = scmp.eq.s32.totalorder %s14, 0
      %p95 = por %p93, %p94
      %p96 = scmp.ne.s32.totalorder %s88, %s90
      %p97 = scmp.eq.s32.totalorder %s19, 1
      %p98 = por %p96, %p97
      %p99 = scmp.ne.s32.totalorder %s90, %s91
      %p100 = scmp.eq.s32.totalorder %s19, 0
      %p101 = por %p99, %p100
      %p102 = scmp.ne.s32.totalorder %s90, %s91
      %p103 = scmp.eq.s32.totalorder %s20, 1
      %p104 = por %p102, %p103
      %p106 = scmp.ne.s32.totalorder %s91, %s105
      %p107 = scmp.eq.s32.totalorder %s20, 0
      %p108 = por %p106, %p107
      %s110 = sadd.s32 %s109, 1
      %p113 = scmp.eq.s32.totalorder %s14, 1
      %p114 = scmp.ne.s32.totalorder %s109, %s111
      %p115 = scmp.eq.s32.totalorder %s14, 0
      %p116 = por %p114, %p115
      %p117 = scmp.ne.s32.totalorder %s109, %s111
      %p118 = scmp.eq.s32.totalorder %s19, 1
      %p119 = por %p117, %p118
      %p120 = scmp.ne.s32.totalorder %s111, %s112
      %p121 = scmp.eq.s32.totalorder %s19, 0
      %p122 = por %p120, %p121
      %p123 = scmp.ne.s32.totalorder %s111, %s112
      %p124 = scmp.eq.s32.totalorder %s20, 1
      %p125 = por %p123, %p124
      %p127 = scmp.ne.s32.totalorder %s112, %s126
      %p128 = scmp.eq.s32.totalorder %s20, 0
      %p129 = por %p127, %p128
      %s131 = sadd.s32 %s130, 1
      %p134 = scmp.eq.s32.totalorder %s14, 1
      %p135 = scmp.ne.s32.totalorder %s130, %s132
      %p136 = scmp.eq.s32.totalorder %s14, 0
      %p137 = por %p135, %p136
      %p138 = scmp.ne.s32.totalorder %s130, %s132
      %p139 = scmp.eq.s32.totalorder %s19, 1
      %p140 = por %p138, %p139
      %p141 = scmp.ne.s32.totalorder %s132, %s133
      %p142 = scmp.eq.s32.totalorder %s19, 0
      %p143 = por %p141, %p142
      %p144 = scmp.ne.s32.totalorder %s132, %s133
      %p145 = scmp.eq.s32.totalorder %s20, 1
      %p146 = por %p144, %p145
      %p148 = scmp.ne.s32.totalorder %s133, %s147
      %p149 = scmp.eq.s32.totalorder %s20, 0
      %p150 = por %p148, %p149
      %s151 = ssub.s32 %s21, %s33
      %p152 = scmp.eq.s32.totalorder %s151, 0
      %s154 = sadd.s32 %s153, 1
      %s155 = scalar_select %p152, %s153, %s154
      %p158 = pneg %p152
      %p159 = scmp.eq.s32.totalorder %s14, 1
      %p160 = por %p158, %p159
      %p161 = scmp.ne.s32.totalorder %s153, %s156
      %p162 = scmp.eq.s32.totalorder %s14, 0
      %p163 = por %p161, %p162
      %p164 = scmp.ne.s32.totalorder %s153, %s156
      %p165 = scmp.eq.s32.totalorder %s19, 1
      %p166 = por %p164, %p165
      %p167 = scmp.ne.s32.totalorder %s156, %s157
      %p168 = scmp.eq.s32.totalorder %s19, 0
      %p169 = por %p167, %p168
      %p170 = scmp.ne.s32.totalorder %s156, %s157
      %p171 = scmp.eq.s32.totalorder %s20, 1
      %p172 = por %p170, %p171
      %p174 = scmp.ne.s32.totalorder %s157, %s173
      %p175 = scmp.eq.s32.totalorder %s20, 0
      %p176 = por %p174, %p175
      %p177 = scmp.le.s32.totalorder 1, %s14
      %p178 = scmp.lt.s32.totalorder %s14, 3
      %p179 = pnand %p177, %p178
      %p180 = pneg %p179
      // Predicated region
      $region9: #{roi_2mlp_head_forward.1} parent=5 // pred_check
        _
      $region10: #{roi_2mlp_head_forward.1} parent=5 // pred_check_branch
        %182 = sbr.rel (%p179) target = $region12
      $region11: #{roi_2mlp_head_forward.1} parent=5 // pred_region
        %s183 = ssub.s32 %s14, 1
        // Predicated region
        $region13: #{roi_2mlp_head_forward.1} parent=11 // pred_check
          %p184 = pneg %p80
        $region14: #{roi_2mlp_head_forward.1} parent=11 // pred_check_branch
          %186 = sbr.rel (%p184) target = $region16
        $region15: #{roi_2mlp_head_forward.1} parent=11 // pred_region
          %s187 = smul.u32 32, %s24
          %p188 = scmp.lt.s32.totalorder %s187, 31
          %s189 = scalar_select %p188, %s187, 31
          %s190 = smul.addr %s189, 4
          %s191 = scalar_lea.vmem %s1, %s190
          %s192 = smul.u32 32, %s24
        $region16: #{roi_2mlp_head_forward.1} parent=11 // pred_fallthru
          _
        // Predicated region
        $region17: #{roi_2mlp_head_forward.1} parent=11 // pred_check
          %p193 = pneg %p101
        $region18: #{roi_2mlp_head_forward.1} parent=11 // pred_check_branch
          %195 = sbr.rel (%p193) target = $region20
        $region19: #{roi_2mlp_head_forward.1} parent=11 // pred_region
          _
        $region20: #{roi_2mlp_head_forward.1} parent=11 // pred_fallthru
          _
        // Predicated region
        $region21: #{roi_2mlp_head_forward.1} parent=11 // pred_check
          %p196 = pneg %p122
        $region22: #{roi_2mlp_head_forward.1} parent=11 // pred_check_branch
          %198 = sbr.rel (%p196) target = $region24
        $region23: #{roi_2mlp_head_forward.1} parent=11 // pred_region
          _
        $region24: #{roi_2mlp_head_forward.1} parent=11 // pred_fallthru
          _
        // Predicated region
        $region25: #{roi_2mlp_head_forward.1} parent=11 // pred_check
          %p199 = pneg %p143
        $region26: #{roi_2mlp_head_forward.1} parent=11 // pred_check_branch
          %201 = sbr.rel (%p199) target = $region28
        $region27: #{roi_2mlp_head_forward.1} parent=11 // pred_region
          _
        $region28: #{roi_2mlp_head_forward.1} parent=11 // pred_fallthru
          _
      $region12: #{roi_2mlp_head_forward.1} parent=5 // pred_fallthru
        _
      %p202 = scmp.lt.s32.totalorder %s14, 2
      // Predicated region
      $region29: #{roi_2mlp_head_forward.1} parent=5 // pred_check
        %p203 = pneg %p202
      $region30: #{roi_2mlp_head_forward.1} parent=5 // pred_check_branch
        %205 = sbr.rel (%p203) target = $region32
      $region31: #{roi_2mlp_head_forward.1} parent=5 // pred_region
        // Predicated region
        $region33: #{roi_2mlp_head_forward.1} parent=31 // pred_check
          %p206 = pneg %p48
        $region34: #{roi_2mlp_head_forward.1} parent=31 // pred_check_branch
          %208 = sbr.rel (%p206) target = $region36
        $region35: #{roi_2mlp_head_forward.1} parent=31 // pred_region
          %s209 = smul.u32 32, %s21
          %s210 = smul.u32 2, %s22
          %p211 = scmp.lt.s32.totalorder %s209, 63
          %s212 = scalar_select %p211, %s209, 63
          %p213 = scmp.lt.s32.totalorder %s210, 1
          %s214 = scalar_select %p213, %s210, 1
          %s215 = smul.addr %s212, 2
          %s216 = sadd.s32 %s214, %s215
          %s217 = smul.addr %s216, 8
          %s218 = scalar_lea.vmem %s0, %s217
          %s219 = smul.u32 32, %s21
          %s220 = smul.u32 2, %s22
        $region36: #{roi_2mlp_head_forward.1} parent=31 // pred_fallthru
          _
      $region32: #{roi_2mlp_head_forward.1} parent=5 // pred_fallthru
        _
      %p221 = scmp.le.s32.totalorder 1, %s14
      %p222 = scmp.lt.s32.totalorder %s14, 3
      %p223 = pnand %p221, %p222
      %p224 = pneg %p223
      // Predicated region
      $region37: #{roi_2mlp_head_forward.1} parent=5 // pred_check
        _
      $region38: #{roi_2mlp_head_forward.1} parent=5 // pred_check_branch
        %226 = sbr.rel (%p223) target = $region40
      $region39: #{roi_2mlp_head_forward.1} parent=5 // pred_region
        %s227 = ssub.s32 %s14, 1
        %s228 = smul.u32 32, %s23
        %s229 = smul.u32 2, %s24
        %p230 = scmp.lt.s32.totalorder %s228, 63
        %s231 = scalar_select %p230, %s228, 63
        %p232 = scmp.lt.s32.totalorder %s229, 1
        %s233 = scalar_select %p232, %s229, 1
        %s234 = smul.addr %s231, 2
        %s235 = sadd.s32 %s233, %s234
        %s236 = smul.addr %s235, 8
        %s237 = scalar_lea.vmem %s0, %s236
        %p238 = pneg %p54
        %p239 = pneg %p51
        %s240 = smul.u32 32, %s24
        %p241 = scmp.lt.s32.totalorder %s240, 31
        %s242 = scalar_select %p241, %s240, 31
        %s243 = smul.addr %s242, 4
        %s244 = scalar_lea.vmem %s1, %s243
        %p245 = pneg %p80
        %p246 = pneg %p77
        %p247 = pneg %p101
        %p248 = pneg %p98
        %p249 = pneg %p122
        %p250 = pneg %p119
        %p251 = pneg %p143
        %p252 = pneg %p140
        %p253 = pneg %p169
        %p254 = pneg %p166
        %s255 = sand.u32 %s156, 1
        %s256 = scalar_lea.sflag [#allocation4], %s255
        %s257 = sand.u32 %s156, 1
        %s258 = smul.addr %s257, 256
        %s259 = scalar_lea.vmem [#allocation3], %s258
        %s260 = smul.u32 32, %s23
        %s261 = smul.u32 2, %s24
        %p262 = scmp.lt.s32.totalorder %s260, 63
        %s263 = scalar_select %p262, %s260, 63
        %p264 = scmp.lt.s32.totalorder %s261, 1
        %s265 = scalar_select %p264, %s261, 1
        %s266 = smul.addr %s263, 2
        %s267 = sadd.s32 %s265, %s266
        %s268 = smul.addr %s267, 8
        %s269 = scalar_lea.vmem %s0, %s268
        %s270 = smul.u32 32, %s23
        %s271 = smul.u32 2, %s24
        %s272 = smul.u32 32, %s24
        %p273 = scmp.lt.s32.totalorder %s272, 31
        %s274 = scalar_select %p273, %s272, 31
        %s275 = smul.addr %s274, 4
        %s276 = scalar_lea.vmem %s1, %s275
        %s277 = smul.u32 32, %s24
        %s278 = smul.u32 32, %s23
        %p280 = scmp.eq.s32.totalorder %s24, 0
        // Predicated region
        $region41: #{roi_2mlp_head_forward.1} parent=39 // pred_check
          %p281 = pneg %p280
        $region42: #{roi_2mlp_head_forward.1} parent=39 // pred_check_branch
          %283 = sbr.rel (%p281) target = $region44
        $region43: #{roi_2mlp_head_forward.1} parent=39 // pred_region
          %284 = vst [vmem:[#allocation2] sm:$0xff] 0.0
          %285 = vst [vmem:[#allocation2 + $0x8] sm:$0xff] 0.0
          %286 = vst [vmem:[#allocation2 + $0x10] sm:$0xff] 0.0
          %287 = vst [vmem:[#allocation2 + $0x18] sm:$0xff] 0.0
          %288 = vst [vmem:[#allocation2 + $0x20] sm:$0xff] 0.0
          %289 = vst [vmem:[#allocation2 + $0x28] sm:$0xff] 0.0
          %290 = vst [vmem:[#allocation2 + $0x30] sm:$0xff] 0.0
          %291 = vst [vmem:[#allocation2 + $0x38] sm:$0xff] 0.0
          %292 = vst [vmem:[#allocation2 + $0x40] sm:$0xff] 0.0
          %293 = vst [vmem:[#allocation2 + $0x48] sm:$0xff] 0.0
          %294 = vst [vmem:[#allocation2 + $0x50] sm:$0xff] 0.0
          %295 = vst [vmem:[#allocation2 + $0x58] sm:$0xff] 0.0
          %296 = vst [vmem:[#allocation2 + $0x60] sm:$0xff] 0.0
          %297 = vst [vmem:[#allocation2 + $0x68] sm:$0xff] 0.0
          %298 = vst [vmem:[#allocation2 + $0x70] sm:$0xff] 0.0
          %299 = vst [vmem:[#allocation2 + $0x78] sm:$0xff] 0.0
          %300 = vst [vmem:[#allocation2 + $0x80] sm:$0xff] 0.0
          %301 = vst [vmem:[#allocation2 + $0x88] sm:$0xff] 0.0
          %302 = vst [vmem:[#allocation2 + $0x90] sm:$0xff] 0.0
          %303 = vst [vmem:[#allocation2 + $0x98] sm:$0xff] 0.0
          %304 = vst [vmem:[#allocation2 + $0xa0] sm:$0xff] 0.0
          %305 = vst [vmem:[#allocation2 + $0xa8] sm:$0xff] 0.0
          %306 = vst [vmem:[#allocation2 + $0xb0] sm:$0xff] 0.0
          %307 = vst [vmem:[#allocation2 + $0xb8] sm:$0xff] 0.0
          %308 = vst [vmem:[#allocation2 + $0xc0] sm:$0xff] 0.0
          %309 = vst [vmem:[#allocation2 + $0xc8] sm:$0xff] 0.0
          %310 = vst [vmem:[#allocation2 + $0xd0] sm:$0xff] 0.0
          %311 = vst [vmem:[#allocation2 + $0xd8] sm:$0xff] 0.0
          %312 = vst [vmem:[#allocation2 + $0xe0] sm:$0xff] 0.0
          %313 = vst [vmem:[#allocation2 + $0xe8] sm:$0xff] 0.0
          %314 = vst [vmem:[#allocation2 + $0xf0] sm:$0xff] 0.0
          %315 = vst [vmem:[#allocation2 + $0xf8] sm:$0xff] 0.0
        $region44: #{roi_2mlp_head_forward.1} parent=39 // pred_fallthru
          _
        %v316 = vld [vmem:[%s269] sm:$0xff]
        %v317 = vld [vmem:[%s269 + $0x8] sm:$0xff]
        %v318 = vld [vmem:[%s269 + $0x10] sm:$0xff]
        %v319 = vld [vmem:[%s269 + $0x18] sm:$0xff]
        %v320 = vld [vmem:[%s269 + $0x20] sm:$0xff]
        %v321 = vld [vmem:[%s269 + $0x28] sm:$0xff]
        %v322 = vld [vmem:[%s269 + $0x30] sm:$0xff]
        %v323 = vld [vmem:[%s269 + $0x38] sm:$0xff]
        %v324 = vld [vmem:[%s269 + $0x40] sm:$0xff]
        %v325 = vld [vmem:[%s269 + $0x48] sm:$0xff]
        %v326 = vld [vmem:[%s269 + $0x50] sm:$0xff]
        %v327 = vld [vmem:[%s269 + $0x58] sm:$0xff]
        %v328 = vld [vmem:[%s269 + $0x60] sm:$0xff]
        %v329 = vld [vmem:[%s269 + $0x68] sm:$0xff]
        %v330 = vld [vmem:[%s269 + $0x70] sm:$0xff]
        %v331 = vld [vmem:[%s269 + $0x78] sm:$0xff]
        %v332 = vld [vmem:[%s269 + $0x80] sm:$0xff]
        %v333 = vld [vmem:[%s269 + $0x88] sm:$0xff]
        %v334 = vld [vmem:[%s269 + $0x90] sm:$0xff]
        %v335 = vld [vmem:[%s269 + $0x98] sm:$0xff]
        %v336 = vld [vmem:[%s269 + $0xa0] sm:$0xff]
        %v337 = vld [vmem:[%s269 + $0xa8] sm:$0xff]
        %v338 = vld [vmem:[%s269 + $0xb0] sm:$0xff]
        %v339 = vld [vmem:[%s269 + $0xb8] sm:$0xff]
        %v340 = vld [vmem:[%s269 + $0xc0] sm:$0xff]
        %v341 = vld [vmem:[%s269 + $0xc8] sm:$0xff]
        %v342 = vld [vmem:[%s269 + $0xd0] sm:$0xff]
        %v343 = vld [vmem:[%s269 + $0xd8] sm:$0xff]
        %v344 = vld [vmem:[%s269 + $0xe0] sm:$0xff]
        %v345 = vld [vmem:[%s269 + $0xe8] sm:$0xff]
        %v346 = vld [vmem:[%s269 + $0xf0] sm:$0xff]
        %v347 = vld [vmem:[%s269 + $0xf8] sm:$0xff]
        %v348 = vld [vmem:[%s269 + $0x100] sm:$0xff]
        %v349 = vld [vmem:[%s269 + $0x108] sm:$0xff]
        %v350 = vld [vmem:[%s269 + $0x110] sm:$0xff]
        %v351 = vld [vmem:[%s269 + $0x118] sm:$0xff]
        %v352 = vld [vmem:[%s269 + $0x120] sm:$0xff]
        %v353 = vld [vmem:[%s269 + $0x128] sm:$0xff]
        %v354 = vld [vmem:[%s269 + $0x130] sm:$0xff]
        %v355 = vld [vmem:[%s269 + $0x138] sm:$0xff]
        %v356 = vld [vmem:[%s269 + $0x140] sm:$0xff]
        %v357 = vld [vmem:[%s269 + $0x148] sm:$0xff]
        %v358 = vld [vmem:[%s269 + $0x150] sm:$0xff]
        %v359 = vld [vmem:[%s269 + $0x158] sm:$0xff]
        %v360 = vld [vmem:[%s269 + $0x160] sm:$0xff]
        %v361 = vld [vmem:[%s269 + $0x168] sm:$0xff]
        %v362 = vld [vmem:[%s269 + $0x170] sm:$0xff]
        %v363 = vld [vmem:[%s269 + $0x178] sm:$0xff]
        %v364 = vld [vmem:[%s269 + $0x180] sm:$0xff]
        %v365 = vld [vmem:[%s269 + $0x188] sm:$0xff]
        %v366 = vld [vmem:[%s269 + $0x190] sm:$0xff]
        %v367 = vld [vmem:[%s269 + $0x198] sm:$0xff]
        %v368 = vld [vmem:[%s269 + $0x1a0] sm:$0xff]
        %v369 = vld [vmem:[%s269 + $0x1a8] sm:$0xff]
        %v370 = vld [vmem:[%s269 + $0x1b0] sm:$0xff]
        %v371 = vld [vmem:[%s269 + $0x1b8] sm:$0xff]
        %v372 = vld [vmem:[%s269 + $0x1c0] sm:$0xff]
        %v373 = vld [vmem:[%s269 + $0x1c8] sm:$0xff]
        %v374 = vld [vmem:[%s269 + $0x1d0] sm:$0xff]
        %v375 = vld [vmem:[%s269 + $0x1d8] sm:$0xff]
        %v376 = vld [vmem:[%s269 + $0x1e0] sm:$0xff]
        %v377 = vld [vmem:[%s269 + $0x1e8] sm:$0xff]
        %v378 = vld [vmem:[%s269 + $0x1f0] sm:$0xff]
        %v379 = vld [vmem:[%s269 + $0x1f8] sm:$0xff]
        %v380 = vpack.c.bf16 %v318, %v316
        %v381 = vpack.c.bf16 %v319, %v317
        %v382 = vpack.c.bf16 %v322, %v320
        %v383 = vpack.c.bf16 %v323, %v321
        %v384 = vpack.c.bf16 %v326, %v324
        %v385 = vpack.c.bf16 %v327, %v325
        %v386 = vpack.c.bf16 %v330, %v328
        %v387 = vpack.c.bf16 %v331, %v329
        %v388 = vpack.c.bf16 %v334, %v332
        %v389 = vpack.c.bf16 %v335, %v333
        %v390 = vpack.c.bf16 %v338, %v336
        %v391 = vpack.c.bf16 %v339, %v337
        %v392 = vpack.c.bf16 %v342, %v340
        %v393 = vpack.c.bf16 %v343, %v341
        %v394 = vpack.c.bf16 %v346, %v344
        %v395 = vpack.c.bf16 %v347, %v345
        %v396 = vpack.c.bf16 %v350, %v348
        %v397 = vpack.c.bf16 %v351, %v349
        %v398 = vpack.c.bf16 %v354, %v352
        %v399 = vpack.c.bf16 %v355, %v353
        %v400 = vpack.c.bf16 %v358, %v356
        %v401 = vpack.c.bf16 %v359, %v357
        %v402 = vpack.c.bf16 %v362, %v360
        %v403 = vpack.c.bf16 %v363, %v361
        %v404 = vpack.c.bf16 %v366, %v364
        %v405 = vpack.c.bf16 %v367, %v365
        %v406 = vpack.c.bf16 %v370, %v368
        %v407 = vpack.c.bf16 %v371, %v369
        %v408 = vpack.c.bf16 %v374, %v372
        %v409 = vpack.c.bf16 %v375, %v373
        %v410 = vpack.c.bf16 %v378, %v376
        %v411 = vpack.c.bf16 %v379, %v377
        %v412 = vld [vmem:[#allocation2] sm:$0xff]
        %v413 = vld [vmem:[#allocation2 + $0x8] sm:$0xff]
        %v414 = vld [vmem:[#allocation2 + $0x10] sm:$0xff]
        %v415 = vld [vmem:[#allocation2 + $0x18] sm:$0xff]
        %v416 = vld [vmem:[#allocation2 + $0x20] sm:$0xff]
        %v417 = vld [vmem:[#allocation2 + $0x28] sm:$0xff]
        %v418 = vld [vmem:[#allocation2 + $0x30] sm:$0xff]
        %v419 = vld [vmem:[#allocation2 + $0x38] sm:$0xff]
        %v420 = vld [vmem:[#allocation2 + $0x40] sm:$0xff]
        %v421 = vld [vmem:[#allocation2 + $0x48] sm:$0xff]
        %v422 = vld [vmem:[#allocation2 + $0x50] sm:$0xff]
        %v423 = vld [vmem:[#allocation2 + $0x58] sm:$0xff]
        %v424 = vld [vmem:[#allocation2 + $0x60] sm:$0xff]
        %v425 = vld [vmem:[#allocation2 + $0x68] sm:$0xff]
        %v426 = vld [vmem:[#allocation2 + $0x70] sm:$0xff]
        %v427 = vld [vmem:[#allocation2 + $0x78] sm:$0xff]
        %v428 = vld [vmem:[#allocation2 + $0x80] sm:$0xff]
        %v429 = vld [vmem:[#allocation2 + $0x88] sm:$0xff]
        %v430 = vld [vmem:[#allocation2 + $0x90] sm:$0xff]
        %v431 = vld [vmem:[#allocation2 + $0x98] sm:$0xff]
        %v432 = vld [vmem:[#allocation2 + $0xa0] sm:$0xff]
        %v433 = vld [vmem:[#allocation2 + $0xa8] sm:$0xff]
        %v434 = vld [vmem:[#allocation2 + $0xb0] sm:$0xff]
        %v435 = vld [vmem:[#allocation2 + $0xb8] sm:$0xff]
        %v436 = vld [vmem:[#allocation2 + $0xc0] sm:$0xff]
        %v437 = vld [vmem:[#allocation2 + $0xc8] sm:$0xff]
        %v438 = vld [vmem:[#allocation2 + $0xd0] sm:$0xff]
        %v439 = vld [vmem:[#allocation2 + $0xd8] sm:$0xff]
        %v440 = vld [vmem:[#allocation2 + $0xe0] sm:$0xff]
        %v441 = vld [vmem:[#allocation2 + $0xe8] sm:$0xff]
        %v442 = vld [vmem:[#allocation2 + $0xf0] sm:$0xff]
        %v443 = vld [vmem:[#allocation2 + $0xf8] sm:$0xff]
        %v444 = vld [vmem:[%s276] sm:$0xf]
        %v445 = vld [vmem:[%s276 + $0x4] sm:$0xf]
        %v446 = vld [vmem:[%s276 + $0x8] sm:$0xf]
        %v447 = vld [vmem:[%s276 + $0xc] sm:$0xf]
        %v448 = vld [vmem:[%s276 + $0x10] sm:$0xf]
        %v449 = vld [vmem:[%s276 + $0x14] sm:$0xf]
        %v450 = vld [vmem:[%s276 + $0x18] sm:$0xf]
        %v451 = vld [vmem:[%s276 + $0x1c] sm:$0xf]
        %v452 = vld [vmem:[%s276 + $0x20] sm:$0xf]
        %v453 = vld [vmem:[%s276 + $0x24] sm:$0xf]
        %v454 = vld [vmem:[%s276 + $0x28] sm:$0xf]
        %v455 = vld [vmem:[%s276 + $0x2c] sm:$0xf]
        %v456 = vld [vmem:[%s276 + $0x30] sm:$0xf]
        %v457 = vld [vmem:[%s276 + $0x34] sm:$0xf]
        %v458 = vld [vmem:[%s276 + $0x38] sm:$0xf]
        %v459 = vld [vmem:[%s276 + $0x3c] sm:$0xf]
        %v460 = vld [vmem:[%s276 + $0x40] sm:$0xf]
        %v461 = vld [vmem:[%s276 + $0x44] sm:$0xf]
        %v462 = vld [vmem:[%s276 + $0x48] sm:$0xf]
        %v463 = vld [vmem:[%s276 + $0x4c] sm:$0xf]
        %v464 = vld [vmem:[%s276 + $0x50] sm:$0xf]
        %v465 = vld [vmem:[%s276 + $0x54] sm:$0xf]
        %v466 = vld [vmem:[%s276 + $0x58] sm:$0xf]
        %v467 = vld [vmem:[%s276 + $0x5c] sm:$0xf]
        %v468 = vld [vmem:[%s276 + $0x60] sm:$0xf]
        %v469 = vld [vmem:[%s276 + $0x64] sm:$0xf]
        %v470 = vld [vmem:[%s276 + $0x68] sm:$0xf]
        %v471 = vld [vmem:[%s276 + $0x6c] sm:$0xf]
        %v472 = vld [vmem:[%s276 + $0x70] sm:$0xf]
        %v473 = vld [vmem:[%s276 + $0x74] sm:$0xf]
        %v474 = vld [vmem:[%s276 + $0x78] sm:$0xf]
        %v475 = vld [vmem:[%s276 + $0x7c] sm:$0xf]
        %v508 = vunpack.c.l.b16 %v444
        %v509 = vunpack.c.l.b16 %v445
        %v510 = vunpack.c.l.b16 %v446
        %v511 = vunpack.c.l.b16 %v447
        %v512 = vunpack.c.l.b16 %v448
        %v513 = vunpack.c.l.b16 %v449
        %v514 = vunpack.c.l.b16 %v450
        %v515 = vunpack.c.l.b16 %v451
        %v516 = vunpack.c.l.b16 %v452
        %v517 = vunpack.c.l.b16 %v453
        %v518 = vunpack.c.l.b16 %v454
        %v519 = vunpack.c.l.b16 %v455
        %v520 = vunpack.c.l.b16 %v456
        %v521 = vunpack.c.l.b16 %v457
        %v522 = vunpack.c.l.b16 %v458
        %v523 = vunpack.c.l.b16 %v459
        %v524 = vunpack.c.l.b16 %v460
        %v525 = vunpack.c.l.b16 %v461
        %v526 = vunpack.c.l.b16 %v462
        %v527 = vunpack.c.l.b16 %v463
        %v528 = vunpack.c.l.b16 %v464
        %v529 = vunpack.c.l.b16 %v465
        %v530 = vunpack.c.l.b16 %v466
        %v531 = vunpack.c.l.b16 %v467
        %v532 = vunpack.c.l.b16 %v468
        %v533 = vunpack.c.l.b16 %v469
        %v534 = vunpack.c.l.b16 %v470
        %v535 = vunpack.c.l.b16 %v471
        %v536 = vunpack.c.l.b16 %v472
        %v537 = vunpack.c.l.b16 %v473
        %v538 = vunpack.c.l.b16 %v474
        %v539 = vunpack.c.l.b16 %v475
        %v540 = vpack.c.b16 %v509, %v508
        %v541 = vpack.c.b16 %v511, %v510
        %v542 = vpack.c.b16 %v513, %v512
        %v543 = vpack.c.b16 %v515, %v514
        %v544 = vpack.c.b16 %v517, %v516
        %v545 = vpack.c.b16 %v519, %v518
        %v546 = vpack.c.b16 %v521, %v520
        %v547 = vpack.c.b16 %v523, %v522
        %v548 = vpack.c.b16 %v525, %v524
        %v549 = vpack.c.b16 %v527, %v526
        %v550 = vpack.c.b16 %v529, %v528
        %v551 = vpack.c.b16 %v531, %v530
        %v552 = vpack.c.b16 %v533, %v532
        %v553 = vpack.c.b16 %v535, %v534
        %v554 = vpack.c.b16 %v537, %v536
        %v555 = vpack.c.b16 %v539, %v538
        %572 = vmatprep.subr.bf16.mxu0 0
        %573 = vmatpush1.bf16.msra.mxu0 %v540
        %574 = vmatprep.subr.bf16.mxu0 0
        %575 = vmatpush1.bf16.msra.mxu0 %v541
        %576 = vmatprep.subr.bf16.mxu0 0
        %577 = vmatpush1.bf16.msra.mxu0 %v542
        %578 = vmatprep.subr.bf16.mxu0 0
        %579 = vmatpush1.bf16.msra.mxu0 %v543
        %580 = vmatprep.subr.bf16.mxu0 0
        %581 = vmatpush1.bf16.msra.mxu0 %v544
        %582 = vmatprep.subr.bf16.mxu0 0
        %583 = vmatpush1.bf16.msra.mxu0 %v545
        %584 = vmatprep.subr.bf16.mxu0 0
        %585 = vmatpush1.bf16.msra.mxu0 %v546
        %586 = vmatprep.subr.bf16.mxu0 0
        %587 = vmatpush1.bf16.msra.mxu0 %v547
        %588 = vmatprep.subr.bf16.mxu0 0
        %589 = vmatpush1.bf16.msra.mxu0 %v548
        %590 = vmatprep.subr.bf16.mxu0 0
        %591 = vmatpush1.bf16.msra.mxu0 %v549
        %592 = vmatprep.subr.bf16.mxu0 0
        %593 = vmatpush1.bf16.msra.mxu0 %v550
        %594 = vmatprep.subr.bf16.mxu0 0
        %595 = vmatpush1.bf16.msra.mxu0 %v551
        %596 = vmatprep.subr.bf16.mxu0 0
        %597 = vmatpush1.bf16.msra.mxu0 %v552
        %598 = vmatprep.subr.bf16.mxu0 0
        %599 = vmatpush1.bf16.msra.mxu0 %v553
        %600 = vmatprep.subr.bf16.mxu0 0
        %601 = vmatpush1.bf16.msra.mxu0 %v554
        %602 = vmatprep.subr.bf16.mxu0 0
        %603 = vmatpush1.bf16.msra.mxu0 %v555
        %604 = vmatprep.mubr.bf16.mxu0 %v381
        %605 = vmatmul.mubr.bf16.gmra.mrb[0].mxu0 %v380
        %v606 = vpop.f32.mrb[0].mxu0
        %v607 = vadd.f32 0.0, %v606
        %v608 = vpop.f32.mrb[0].mxu0
        %v609 = vpop.f32.mrb[0].mxu0
        %v610 = vadd.f32 0.0, %v609
        %v611 = vpop.f32.mrb[0].mxu0
        %612 = vmatprep.mubr.bf16.mxu0 %v383
        %613 = vmatmul.mubr.bf16.gmra.mrb[0].mxu0 %v382
        %v614 = vpop.f32.mrb[0].mxu0
        %v615 = vadd.f32 0.0, %v614
        %v616 = vpop.f32.mrb[0].mxu0
        %v617 = vpop.f32.mrb[0].mxu0
        %v618 = vadd.f32 0.0, %v617
        %v619 = vpop.f32.mrb[0].mxu0
        %620 = vmatprep.mubr.bf16.mxu0 %v385
        %621 = vmatmul.mubr.bf16.gmra.mrb[0].mxu0 %v384
        %v622 = vpop.f32.mrb[0].mxu0
        %v623 = vadd.f32 0.0, %v622
        %v624 = vpop.f32.mrb[0].mxu0
        %v625 = vpop.f32.mrb[0].mxu0
        %v626 = vadd.f32 0.0, %v625
        %v627 = vpop.f32.mrb[0].mxu0
        %628 = vmatprep.mubr.bf16.mxu0 %v387
        %629 = vmatmul.mubr.bf16.gmra.mrb[0].mxu0 %v386
        %v630 = vpop.f32.mrb[0].mxu0
        %v631 = vadd.f32 0.0, %v630
        %v632 = vpop.f32.mrb[0].mxu0
        %v633 = vpop.f32.mrb[0].mxu0
        %v634 = vadd.f32 0.0, %v633
        %v635 = vpop.f32.mrb[0].mxu0
        %636 = vmatprep.mubr.bf16.mxu0 %v389
        %637 = vmatmul.mubr.bf16.gmra.mrb[0].mxu0 %v388
        %v638 = vpop.f32.mrb[0].mxu0
        %v639 = vadd.f32 0.0, %v638
        %v640 = vpop.f32.mrb[0].mxu0
        %v641 = vpop.f32.mrb[0].mxu0
        %v642 = vadd.f32 0.0, %v641
        %v643 = vpop.f32.mrb[0].mxu0
        %644 = vmatprep.mubr.bf16.mxu0 %v391
        %645 = vmatmul.mubr.bf16.gmra.mrb[0].mxu0 %v390
        %v646 = vpop.f32.mrb[0].mxu0
        %v647 = vadd.f32 0.0, %v646
        %v648 = vpop.f32.mrb[0].mxu0
        %v649 = vpop.f32.mrb[0].mxu0
        %v650 = vadd.f32 0.0, %v649
        %v651 = vpop.f32.mrb[0].mxu0
        %652 = vmatprep.mubr.bf16.mxu0 %v393
        %653 = vmatmul.mubr.bf16.gmra.mrb[0].mxu0 %v392
        %v654 = vpop.f32.mrb[0].mxu0
        %v655 = vadd.f32 0.0, %v654
        %v656 = vpop.f32.mrb[0].mxu0
        %v657 = vpop.f32.mrb[0].mxu0
        %v658 = vadd.f32 0.0, %v657
        %v659 = vpop.f32.mrb[0].mxu0
        %660 = vmatprep.mubr.bf16.mxu0 %v395
        %661 = vmatmul.mubr.bf16.gmra.mrb[0].mxu0 %v394
        %v662 = vpop.f32.mrb[0].mxu0
        %v663 = vadd.f32 0.0, %v662
        %v664 = vpop.f32.mrb[0].mxu0
        %v665 = vpop.f32.mrb[0].mxu0
        %v666 = vadd.f32 0.0, %v665
        %v667 = vpop.f32.mrb[0].mxu0
        %668 = vmatprep.mubr.bf16.mxu0 %v397
        %669 = vmatmul.mubr.bf16.gmra.mrb[0].mxu0 %v396
        %v670 = vpop.f32.mrb[0].mxu0
        %v671 = vadd.f32 0.0, %v670
        %v672 = vpop.f32.mrb[0].mxu0
        %v673 = vpop.f32.mrb[0].mxu0
        %v674 = vadd.f32 0.0, %v673
        %v675 = vpop.f32.mrb[0].mxu0
        %676 = vmatprep.mubr.bf16.mxu0 %v399
        %677 = vmatmul.mubr.bf16.gmra.mrb[0].mxu0 %v398
        %v678 = vpop.f32.mrb[0].mxu0
        %v679 = vadd.f32 0.0, %v678
        %v680 = vpop.f32.mrb[0].mxu0
        %v681 = vpop.f32.mrb[0].mxu0
        %v682 = vadd.f32 0.0, %v681
        %v683 = vpop.f32.mrb[0].mxu0
        %684 = vmatprep.mubr.bf16.mxu0 %v401
        %685 = vmatmul.mubr.bf16.gmra.mrb[0].mxu0 %v400
        %v686 = vpop.f32.mrb[0].mxu0
        %v687 = vadd.f32 0.0, %v686
        %v688 = vpop.f32.mrb[0].mxu0
        %v689 = vpop.f32.mrb[0].mxu0
        %v690 = vadd.f32 0.0, %v689
        %v691 = vpop.f32.mrb[0].mxu0
        %692 = vmatprep.mubr.bf16.mxu0 %v403
        %693 = vmatmul.mubr.bf16.gmra.mrb[0].mxu0 %v402
        %v694 = vpop.f32.mrb[0].mxu0
        %v695 = vadd.f32 0.0, %v694
        %v696 = vpop.f32.mrb[0].mxu0
        %v697 = vpop.f32.mrb[0].mxu0
        %v698 = vadd.f32 0.0, %v697
        %v699 = vpop.f32.mrb[0].mxu0
        %700 = vmatprep.mubr.bf16.mxu0 %v405
        %701 = vmatmul.mubr.bf16.gmra.mrb[0].mxu0 %v404
        %v702 = vpop.f32.mrb[0].mxu0
        %v703 = vadd.f32 0.0, %v702
        %v704 = vpop.f32.mrb[0].mxu0
        %v705 = vpop.f32.mrb[0].mxu0
        %v706 = vadd.f32 0.0, %v705
        %v707 = vpop.f32.mrb[0].mxu0
        %708 = vmatprep.mubr.bf16.mxu0 %v407
        %709 = vmatmul.mubr.bf16.gmra.mrb[0].mxu0 %v406
        %v710 = vpop.f32.mrb[0].mxu0
        %v711 = vadd.f32 0.0, %v710
        %v712 = vpop.f32.mrb[0].mxu0
        %v713 = vpop.f32.mrb[0].mxu0
        %v714 = vadd.f32 0.0, %v713
        %v715 = vpop.f32.mrb[0].mxu0
        %716 = vmatprep.mubr.bf16.mxu0 %v409
        %717 = vmatmul.mubr.bf16.gmra.mrb[0].mxu0 %v408
        %v718 = vpop.f32.mrb[0].mxu0
        %v719 = vadd.f32 0.0, %v718
        %v720 = vpop.f32.mrb[0].mxu0
        %v721 = vpop.f32.mrb[0].mxu0
        %v722 = vadd.f32 0.0, %v721
        %v723 = vpop.f32.mrb[0].mxu0
        %724 = vmatprep.mubr.bf16.mxu0 %v411
        %725 = vmatmul.mubr.bf16.gmra.mrb[0].mxu0 %v410
        %v726 = vpop.f32.mrb[0].mxu0
        %v727 = vadd.f32 0.0, %v726
        %v728 = vpop.f32.mrb[0].mxu0
        %v729 = vpop.f32.mrb[0].mxu0
        %v730 = vadd.f32 0.0, %v729
        %v731 = vpop.f32.mrb[0].mxu0
        %732 = vdwg.mxu0
        %v733 = vadd.f32 %v412, %v607
        %v734 = vadd.f32 %v413, %v610
        %v735 = vadd.f32 %v414, %v615
        %v736 = vadd.f32 %v415, %v618
        %v737 = vadd.f32 %v416, %v623
        %v738 = vadd.f32 %v417, %v626
        %v739 = vadd.f32 %v418, %v631
        %v740 = vadd.f32 %v419, %v634
        %v741 = vadd.f32 %v420, %v639
        %v742 = vadd.f32 %v421, %v642
        %v743 = vadd.f32 %v422, %v647
        %v744 = vadd.f32 %v423, %v650
        %v745 = vadd.f32 %v424, %v655
        %v746 = vadd.f32 %v425, %v658
        %v747 = vadd.f32 %v426, %v663
        %v748 = vadd.f32 %v427, %v666
        %v749 = vadd.f32 %v428, %v671
        %v750 = vadd.f32 %v429, %v674
        %v751 = vadd.f32 %v430, %v679
        %v752 = vadd.f32 %v431, %v682
        %v753 = vadd.f32 %v432, %v687
        %v754 = vadd.f32 %v433, %v690
        %v755 = vadd.f32 %v434, %v695
        %v756 = vadd.f32 %v435, %v698
        %v757 = vadd.f32 %v436, %v703
        %v758 = vadd.f32 %v437, %v706
        %v759 = vadd.f32 %v438, %v711
        %v760 = vadd.f32 %v439, %v714
        %v761 = vadd.f32 %v440, %v719
        %v762 = vadd.f32 %v441, %v722
        %v763 = vadd.f32 %v442, %v727
        %v764 = vadd.f32 %v443, %v730
        %765 = vst [vmem:[#allocation2] sm:$0xff] %v733
        %766 = vst [vmem:[#allocation2 + $0x8] sm:$0xff] %v734
        %767 = vst [vmem:[#allocation2 + $0x10] sm:$0xff] %v735
        %768 = vst [vmem:[#allocation2 + $0x18] sm:$0xff] %v736
        %769 = vst [vmem:[#allocation2 + $0x20] sm:$0xff] %v737
        %770 = vst [vmem:[#allocation2 + $0x28] sm:$0xff] %v738
        %771 = vst [vmem:[#allocation2 + $0x30] sm:$0xff] %v739
        %772 = vst [vmem:[#allocation2 + $0x38] sm:$0xff] %v740
        %773 = vst [vmem:[#allocation2 + $0x40] sm:$0xff] %v741
        %774 = vst [vmem:[#allocation2 + $0x48] sm:$0xff] %v742
        %775 = vst [vmem:[#allocation2 + $0x50] sm:$0xff] %v743
        %776 = vst [vmem:[#allocation2 + $0x58] sm:$0xff] %v744
        %777 = vst [vmem:[#allocation2 + $0x60] sm:$0xff] %v745
        %778 = vst [vmem:[#allocation2 + $0x68] sm:$0xff] %v746
        %779 = vst [vmem:[#allocation2 + $0x70] sm:$0xff] %v747
        %780 = vst [vmem:[#allocation2 + $0x78] sm:$0xff] %v748
        %781 = vst [vmem:[#allocation2 + $0x80] sm:$0xff] %v749
        %782 = vst [vmem:[#allocation2 + $0x88] sm:$0xff] %v750
        %783 = vst [vmem:[#allocation2 + $0x90] sm:$0xff] %v751
        %784 = vst [vmem:[#allocation2 + $0x98] sm:$0xff] %v752
        %785 = vst [vmem:[#allocation2 + $0xa0] sm:$0xff] %v753
        %786 = vst [vmem:[#allocation2 + $0xa8] sm:$0xff] %v754
        %787 = vst [vmem:[#allocation2 + $0xb0] sm:$0xff] %v755
        %788 = vst [vmem:[#allocation2 + $0xb8] sm:$0xff] %v756
        %789 = vst [vmem:[#allocation2 + $0xc0] sm:$0xff] %v757
        %790 = vst [vmem:[#allocation2 + $0xc8] sm:$0xff] %v758
        %791 = vst [vmem:[#allocation2 + $0xd0] sm:$0xff] %v759
        %792 = vst [vmem:[#allocation2 + $0xd8] sm:$0xff] %v760
        %793 = vst [vmem:[#allocation2 + $0xe0] sm:$0xff] %v761
        %794 = vst [vmem:[#allocation2 + $0xe8] sm:$0xff] %v762
        %795 = vst [vmem:[#allocation2 + $0xf0] sm:$0xff] %v763
        %796 = vst [vmem:[#allocation2 + $0xf8] sm:$0xff] %v764
        // Predicated region
        $region45: #{roi_2mlp_head_forward.1} parent=39 // pred_check
          %p797 = pneg %p280
        $region46: #{roi_2mlp_head_forward.1} parent=39 // pred_check_branch
          %799 = sbr.rel (%p797) target = $region48
        $region47: #{roi_2mlp_head_forward.1} parent=39 // pred_region
          %v800 = vld [vmem:[#allocation2] sm:$0xff]
          %v801 = vld [vmem:[#allocation2 + $0x8] sm:$0xff]
          %v802 = vld [vmem:[#allocation2 + $0x10] sm:$0xff]
          %v803 = vld [vmem:[#allocation2 + $0x18] sm:$0xff]
          %v804 = vld [vmem:[#allocation2 + $0x20] sm:$0xff]
          %v805 = vld [vmem:[#allocation2 + $0x28] sm:$0xff]
          %v806 = vld [vmem:[#allocation2 + $0x30] sm:$0xff]
          %v807 = vld [vmem:[#allocation2 + $0x38] sm:$0xff]
          %v808 = vld [vmem:[#allocation2 + $0x40] sm:$0xff]
          %v809 = vld [vmem:[#allocation2 + $0x48] sm:$0xff]
          %v810 = vld [vmem:[#allocation2 + $0x50] sm:$0xff]
          %v811 = vld [vmem:[#allocation2 + $0x58] sm:$0xff]
          %v812 = vld [vmem:[#allocation2 + $0x60] sm:$0xff]
          %v813 = vld [vmem:[#allocation2 + $0x68] sm:$0xff]
          %v814 = vld [vmem:[#allocation2 + $0x70] sm:$0xff]
          %v815 = vld [vmem:[#allocation2 + $0x78] sm:$0xff]
          %v816 = vld [vmem:[#allocation2 + $0x80] sm:$0xff]
          %v817 = vld [vmem:[#allocation2 + $0x88] sm:$0xff]
          %v818 = vld [vmem:[#allocation2 + $0x90] sm:$0xff]
          %v819 = vld [vmem:[#allocation2 + $0x98] sm:$0xff]
          %v820 = vld [vmem:[#allocation2 + $0xa0] sm:$0xff]
          %v821 = vld [vmem:[#allocation2 + $0xa8] sm:$0xff]
          %v822 = vld [vmem:[#allocation2 + $0xb0] sm:$0xff]
          %v823 = vld [vmem:[#allocation2 + $0xb8] sm:$0xff]
          %v824 = vld [vmem:[#allocation2 + $0xc0] sm:$0xff]
          %v825 = vld [vmem:[#allocation2 + $0xc8] sm:$0xff]
          %v826 = vld [vmem:[#allocation2 + $0xd0] sm:$0xff]
          %v827 = vld [vmem:[#allocation2 + $0xd8] sm:$0xff]
          %v828 = vld [vmem:[#allocation2 + $0xe0] sm:$0xff]
          %v829 = vld [vmem:[#allocation2 + $0xe8] sm:$0xff]
          %v830 = vld [vmem:[#allocation2 + $0xf0] sm:$0xff]
          %v831 = vld [vmem:[#allocation2 + $0xf8] sm:$0xff]
          %v832 = vld [vmem:[%s2] sm:$0x1]
          %v834 = vlaneseq
          %v835 = vshrl.u32 %v834, 7
          %v836 = vsub.s32 0, %v835
          %v837 = vrot.slane %v832, %v836
          %v839 = vadd.f32 %v800, %v837
          %v840 = vadd.f32 %v801, %v837
          %v841 = vadd.f32 %v802, %v837
          %v842 = vadd.f32 %v803, %v837
          %v843 = vadd.f32 %v804, %v837
          %v844 = vadd.f32 %v805, %v837
          %v845 = vadd.f32 %v806, %v837
          %v846 = vadd.f32 %v807, %v837
          %v847 = vadd.f32 %v808, %v837
          %v848 = vadd.f32 %v809, %v837
          %v849 = vadd.f32 %v810, %v837
          %v850 = vadd.f32 %v811, %v837
          %v851 = vadd.f32 %v812, %v837
          %v852 = vadd.f32 %v813, %v837
          %v853 = vadd.f32 %v814, %v837
          %v854 = vadd.f32 %v815, %v837
          %v855 = vadd.f32 %v816, %v837
          %v856 = vadd.f32 %v817, %v837
          %v857 = vadd.f32 %v818, %v837
          %v858 = vadd.f32 %v819, %v837
          %v859 = vadd.f32 %v820, %v837
          %v860 = vadd.f32 %v821, %v837
          %v861 = vadd.f32 %v822, %v837
          %v862 = vadd.f32 %v823, %v837
          %v863 = vadd.f32 %v824, %v837
          %v864 = vadd.f32 %v825, %v837
          %v865 = vadd.f32 %v826, %v837
          %v866 = vadd.f32 %v827, %v837
          %v867 = vadd.f32 %v828, %v837
          %v868 = vadd.f32 %v829, %v837
          %v869 = vadd.f32 %v830, %v837
          %v870 = vadd.f32 %v831, %v837
          %v871 = vmax.f32 %v839, 0.0
          %v872 = vmax.f32 %v840, 0.0
          %v873 = vmax.f32 %v841, 0.0
          %v874 = vmax.f32 %v842, 0.0
          %v875 = vmax.f32 %v843, 0.0
          %v876 = vmax.f32 %v844, 0.0
          %v877 = vmax.f32 %v845, 0.0
          %v878 = vmax.f32 %v846, 0.0
          %v879 = vmax.f32 %v847, 0.0
          %v880 = vmax.f32 %v848, 0.0
          %v881 = vmax.f32 %v849, 0.0
          %v882 = vmax.f32 %v850, 0.0
          %v883 = vmax.f32 %v851, 0.0
          %v884 = vmax.f32 %v852, 0.0
          %v885 = vmax.f32 %v853, 0.0
          %v886 = vmax.f32 %v854, 0.0
          %v887 = vmax.f32 %v855, 0.0
          %v888 = vmax.f32 %v856, 0.0
          %v889 = vmax.f32 %v857, 0.0
          %v890 = vmax.f32 %v858, 0.0
          %v891 = vmax.f32 %v859, 0.0
          %v892 = vmax.f32 %v860, 0.0
          %v893 = vmax.f32 %v861, 0.0
          %v894 = vmax.f32 %v862, 0.0
          %v895 = vmax.f32 %v863, 0.0
          %v896 = vmax.f32 %v864, 0.0
          %v897 = vmax.f32 %v865, 0.0
          %v898 = vmax.f32 %v866, 0.0
          %v899 = vmax.f32 %v867, 0.0
          %v900 = vmax.f32 %v868, 0.0
          %v901 = vmax.f32 %v869, 0.0
          %v902 = vmax.f32 %v870, 0.0
          %v903 = vpack.c.bf16 %v872, %v871
          %v904 = vpack.c.bf16 %v874, %v873
          %v905 = vpack.c.bf16 %v876, %v875
          %v906 = vpack.c.bf16 %v878, %v877
          %v907 = vpack.c.bf16 %v880, %v879
          %v908 = vpack.c.bf16 %v882, %v881
          %v909 = vpack.c.bf16 %v884, %v883
          %v910 = vpack.c.bf16 %v886, %v885
          %v911 = vpack.c.bf16 %v888, %v887
          %v912 = vpack.c.bf16 %v890, %v889
          %v913 = vpack.c.bf16 %v892, %v891
          %v914 = vpack.c.bf16 %v894, %v893
          %v915 = vpack.c.bf16 %v896, %v895
          %v916 = vpack.c.bf16 %v898, %v897
          %v917 = vpack.c.bf16 %v900, %v899
          %v918 = vpack.c.bf16 %v902, %v901
          %v919 = vld [vmem:[%s3] sm:$0xf]
          %v920 = vld [vmem:[%s3 + $0x4] sm:$0xf]
          %v921 = vld [vmem:[%s3 + $0x8] sm:$0xf]
          %v922 = vld [vmem:[%s3 + $0xc] sm:$0xf]
          %v923 = vld [vmem:[%s3 + $0x10] sm:$0xf]
          %v924 = vld [vmem:[%s3 + $0x14] sm:$0xf]
          %v925 = vld [vmem:[%s3 + $0x18] sm:$0xf]
          %v926 = vld [vmem:[%s3 + $0x1c] sm:$0xf]
          %v927 = vld [vmem:[%s3 + $0x20] sm:$0xf]
          %v928 = vld [vmem:[%s3 + $0x24] sm:$0xf]
          %v929 = vld [vmem:[%s3 + $0x28] sm:$0xf]
          %v930 = vld [vmem:[%s3 + $0x2c] sm:$0xf]
          %v931 = vld [vmem:[%s3 + $0x30] sm:$0xf]
          %v932 = vld [vmem:[%s3 + $0x34] sm:$0xf]
          %v933 = vld [vmem:[%s3 + $0x38] sm:$0xf]
          %v934 = vld [vmem:[%s3 + $0x3c] sm:$0xf]
          %v935 = vld [vmem:[%s4] sm:$0x1]
          %v937 = vlaneseq
          %v938 = vshrl.u32 %v937, 7
          %v939 = vsub.s32 0, %v938
          %v940 = vrot.slane %v935, %v939
          %v958 = vunpack.c.l.b16 %v919
          %v959 = vunpack.c.l.b16 %v920
          %v960 = vunpack.c.l.b16 %v921
          %v961 = vunpack.c.l.b16 %v922
          %v962 = vunpack.c.l.b16 %v923
          %v963 = vunpack.c.l.b16 %v924
          %v964 = vunpack.c.l.b16 %v925
          %v965 = vunpack.c.l.b16 %v926
          %v966 = vunpack.c.l.b16 %v927
          %v967 = vunpack.c.l.b16 %v928
          %v968 = vunpack.c.l.b16 %v929
          %v969 = vunpack.c.l.b16 %v930
          %v970 = vunpack.c.l.b16 %v931
          %v971 = vunpack.c.l.b16 %v932
          %v972 = vunpack.c.l.b16 %v933
          %v973 = vunpack.c.l.b16 %v934
          %v974 = vpack.c.b16 %v959, %v958
          %v975 = vpack.c.b16 %v961, %v960
          %v976 = vpack.c.b16 %v963, %v962
          %v977 = vpack.c.b16 %v965, %v964
          %v978 = vpack.c.b16 %v967, %v966
          %v979 = vpack.c.b16 %v969, %v968
          %v980 = vpack.c.b16 %v971, %v970
          %v981 = vpack.c.b16 %v973, %v972
          %990 = vmatprep.subr.bf16.mxu0 0
          %991 = vmatpush1.bf16.msra.mxu0 %v974
          %992 = vmatprep.subr.bf16.mxu0 0
          %993 = vmatpush1.bf16.msra.mxu0 %v975
          %994 = vmatprep.subr.bf16.mxu0 0
          %995 = vmatpush1.bf16.msra.mxu0 %v976
          %996 = vmatprep.subr.bf16.mxu0 0
          %997 = vmatpush1.bf16.msra.mxu0 %v977
          %998 = vmatprep.subr.bf16.mxu0 0
          %999 = vmatpush1.bf16.msra.mxu0 %v978
          %1000 = vmatprep.subr.bf16.mxu0 0
          %1001 = vmatpush1.bf16.msra.mxu0 %v979
          %1002 = vmatprep.subr.bf16.mxu0 0
          %1003 = vmatpush1.bf16.msra.mxu0 %v980
          %1004 = vmatprep.subr.bf16.mxu0 0
          %1005 = vmatpush1.bf16.msra.mxu0 %v981
          %1006 = vmatprep.subr.bf16.mxu0 0
          %1007 = vmatpush1.bf16.msra.mxu0 0
          %1008 = vmatprep.subr.bf16.mxu0 0
          %1009 = vmatpush1.bf16.msra.mxu0 0
          %1010 = vmatprep.subr.bf16.mxu0 0
          %1011 = vmatpush1.bf16.msra.mxu0 0
          %1012 = vmatprep.subr.bf16.mxu0 0
          %1013 = vmatpush1.bf16.msra.mxu0 0
          %1014 = vmatprep.subr.bf16.mxu0 0
          %1015 = vmatpush1.bf16.msra.mxu0 0
          %1016 = vmatprep.subr.bf16.mxu0 0
          %1017 = vmatpush1.bf16.msra.mxu0 0
          %1018 = vmatprep.subr.bf16.mxu0 0
          %1019 = vmatpush1.bf16.msra.mxu0 0
          %1020 = vmatprep.subr.bf16.mxu0 0
          %1021 = vmatpush1.bf16.msra.mxu0 0
          %1022 = vmatprep.mubr.bf16.mxu0 0
          %1023 = vmatmul.mubr.bf16.gmra.mrb[0].mxu0 %v903
          %v1024 = vpop.f32.mrb[0].mxu0
          %v1025 = vadd.f32 %v940, %v1024
          %v1026 = vpop.f32.mrb[0].mxu0
          %v1027 = vpop.f32.mrb[0].mxu0
          %v1028 = vadd.f32 %v940, %v1027
          %v1029 = vpop.f32.mrb[0].mxu0
          %1030 = vmatprep.mubr.bf16.mxu0 0
          %1031 = vmatmul.mubr.bf16.gmra.mrb[0].mxu0 %v904
          %v1032 = vpop.f32.mrb[0].mxu0
          %v1033 = vadd.f32 %v940, %v1032
          %v1034 = vpop.f32.mrb[0].mxu0
          %v1035 = vpop.f32.mrb[0].mxu0
          %v1036 = vadd.f32 %v940, %v1035
          %v1037 = vpop.f32.mrb[0].mxu0
          %1038 = vmatprep.mubr.bf16.mxu0 0
          %1039 = vmatmul.mubr.bf16.gmra.mrb[0].mxu0 %v905
          %v1040 = vpop.f32.mrb[0].mxu0
          %v1041 = vadd.f32 %v940, %v1040
          %v1042 = vpop.f32.mrb[0].mxu0
          %v1043 = vpop.f32.mrb[0].mxu0
          %v1044 = vadd.f32 %v940, %v1043
          %v1045 = vpop.f32.mrb[0].mxu0
          %1046 = vmatprep.mubr.bf16.mxu0 0
          %1047 = vmatmul.mubr.bf16.gmra.mrb[0].mxu0 %v906
          %v1048 = vpop.f32.mrb[0].mxu0
          %v1049 = vadd.f32 %v940, %v1048
          %v1050 = vpop.f32.mrb[0].mxu0
          %v1051 = vpop.f32.mrb[0].mxu0
          %v1052 = vadd.f32 %v940, %v1051
          %v1053 = vpop.f32.mrb[0].mxu0
          %1054 = vmatprep.mubr.bf16.mxu0 0
          %1055 = vmatmul.mubr.bf16.gmra.mrb[0].mxu0 %v907
          %v1056 = vpop.f32.mrb[0].mxu0
          %v1057 = vadd.f32 %v940, %v1056
          %v1058 = vpop.f32.mrb[0].mxu0
          %v1059 = vpop.f32.mrb[0].mxu0
          %v1060 = vadd.f32 %v940, %v1059
          %v1061 = vpop.f32.mrb[0].mxu0
          %1062 = vmatprep.mubr.bf16.mxu0 0
          %1063 = vmatmul.mubr.bf16.gmra.mrb[0].mxu0 %v908
          %v1064 = vpop.f32.mrb[0].mxu0
          %v1065 = vadd.f32 %v940, %v1064
          %v1066 = vpop.f32.mrb[0].mxu0
          %v1067 = vpop.f32.mrb[0].mxu0
          %v1068 = vadd.f32 %v940, %v1067
          %v1069 = vpop.f32.mrb[0].mxu0
          %1070 = vmatprep.mubr.bf16.mxu0 0
          %1071 = vmatmul.mubr.bf16.gmra.mrb[0].mxu0 %v909
          %v1072 = vpop.f32.mrb[0].mxu0
          %v1073 = vadd.f32 %v940, %v1072
          %v1074 = vpop.f32.mrb[0].mxu0
          %v1075 = vpop.f32.mrb[0].mxu0
          %v1076 = vadd.f32 %v940, %v1075
          %v1077 = vpop.f32.mrb[0].mxu0
          %1078 = vmatprep.mubr.bf16.mxu0 0
          %1079 = vmatmul.mubr.bf16.gmra.mrb[0].mxu0 %v910
          %v1080 = vpop.f32.mrb[0].mxu0
          %v1081 = vadd.f32 %v940, %v1080
          %v1082 = vpop.f32.mrb[0].mxu0
          %v1083 = vpop.f32.mrb[0].mxu0
          %v1084 = vadd.f32 %v940, %v1083
          %v1085 = vpop.f32.mrb[0].mxu0
          %1086 = vmatprep.mubr.bf16.mxu0 0
          %1087 = vmatmul.mubr.bf16.gmra.mrb[0].mxu0 %v911
          %v1088 = vpop.f32.mrb[0].mxu0
          %v1089 = vadd.f32 %v940, %v1088
          %v1090 = vpop.f32.mrb[0].mxu0
          %v1091 = vpop.f32.mrb[0].mxu0
          %v1092 = vadd.f32 %v940, %v1091
          %v1093 = vpop.f32.mrb[0].mxu0
          %1094 = vmatprep.mubr.bf16.mxu0 0
          %1095 = vmatmul.mubr.bf16.gmra.mrb[0].mxu0 %v912
          %v1096 = vpop.f32.mrb[0].mxu0
          %v1097 = vadd.f32 %v940, %v1096
          %v1098 = vpop.f32.mrb[0].mxu0
          %v1099 = vpop.f32.mrb[0].mxu0
          %v1100 = vadd.f32 %v940, %v1099
          %v1101 = vpop.f32.mrb[0].mxu0
          %1102 = vmatprep.mubr.bf16.mxu0 0
          %1103 = vmatmul.mubr.bf16.gmra.mrb[0].mxu0 %v913
          %v1104 = vpop.f32.mrb[0].mxu0
          %v1105 = vadd.f32 %v940, %v1104
          %v1106 = vpop.f32.mrb[0].mxu0
          %v1107 = vpop.f32.mrb[0].mxu0
          %v1108 = vadd.f32 %v940, %v1107
          %v1109 = vpop.f32.mrb[0].mxu0
          %1110 = vmatprep.mubr.bf16.mxu0 0
          %1111 = vmatmul.mubr.bf16.gmra.mrb[0].mxu0 %v914
          %v1112 = vpop.f32.mrb[0].mxu0
          %v1113 = vadd.f32 %v940, %v1112
          %v1114 = vpop.f32.mrb[0].mxu0
          %v1115 = vpop.f32.mrb[0].mxu0
          %v1116 = vadd.f32 %v940, %v1115
          %v1117 = vpop.f32.mrb[0].mxu0
          %1118 = vmatprep.mubr.bf16.mxu0 0
          %1119 = vmatmul.mubr.bf16.gmra.mrb[0].mxu0 %v915
          %v1120 = vpop.f32.mrb[0].mxu0
          %v1121 = vadd.f32 %v940, %v1120
          %v1122 = vpop.f32.mrb[0].mxu0
          %v1123 = vpop.f32.mrb[0].mxu0
          %v1124 = vadd.f32 %v940, %v1123
          %v1125 = vpop.f32.mrb[0].mxu0
          %1126 = vmatprep.mubr.bf16.mxu0 0
          %1127 = vmatmul.mubr.bf16.gmra.mrb[0].mxu0 %v916
          %v1128 = vpop.f32.mrb[0].mxu0
          %v1129 = vadd.f32 %v940, %v1128
          %v1130 = vpop.f32.mrb[0].mxu0
          %v1131 = vpop.f32.mrb[0].mxu0
          %v1132 = vadd.f32 %v940, %v1131
          %v1133 = vpop.f32.mrb[0].mxu0
          %1134 = vmatprep.mubr.bf16.mxu0 0
          %1135 = vmatmul.mubr.bf16.gmra.mrb[0].mxu0 %v917
          %v1136 = vpop.f32.mrb[0].mxu0
          %v1137 = vadd.f32 %v940, %v1136
          %v1138 = vpop.f32.mrb[0].mxu0
          %v1139 = vpop.f32.mrb[0].mxu0
          %v1140 = vadd.f32 %v940, %v1139
          %v1141 = vpop.f32.mrb[0].mxu0
          %1142 = vmatprep.mubr.bf16.mxu0 0
          %1143 = vmatmul.mubr.bf16.gmra.mrb[0].mxu0 %v918
          %v1144 = vpop.f32.mrb[0].mxu0
          %v1145 = vadd.f32 %v940, %v1144
          %v1146 = vpop.f32.mrb[0].mxu0
          %v1147 = vpop.f32.mrb[0].mxu0
          %v1148 = vadd.f32 %v940, %v1147
          %v1149 = vpop.f32.mrb[0].mxu0
          %1150 = vdwg.mxu0
          %v1151 = vmax.f32 %v1025, 0.0
          %v1152 = vmax.f32 %v1028, 0.0
          %v1153 = vmax.f32 %v1033, 0.0
          %v1154 = vmax.f32 %v1036, 0.0
          %v1155 = vmax.f32 %v1041, 0.0
          %v1156 = vmax.f32 %v1044, 0.0
          %v1157 = vmax.f32 %v1049, 0.0
          %v1158 = vmax.f32 %v1052, 0.0
          %v1159 = vmax.f32 %v1057, 0.0
          %v1160 = vmax.f32 %v1060, 0.0
          %v1161 = vmax.f32 %v1065, 0.0
          %v1162 = vmax.f32 %v1068, 0.0
          %v1163 = vmax.f32 %v1073, 0.0
          %v1164 = vmax.f32 %v1076, 0.0
          %v1165 = vmax.f32 %v1081, 0.0
          %v1166 = vmax.f32 %v1084, 0.0
          %v1167 = vmax.f32 %v1089, 0.0
          %v1168 = vmax.f32 %v1092, 0.0
          %v1169 = vmax.f32 %v1097, 0.0
          %v1170 = vmax.f32 %v1100, 0.0
          %v1171 = vmax.f32 %v1105, 0.0
          %v1172 = vmax.f32 %v1108, 0.0
          %v1173 = vmax.f32 %v1113, 0.0
          %v1174 = vmax.f32 %v1116, 0.0
          %v1175 = vmax.f32 %v1121, 0.0
          %v1176 = vmax.f32 %v1124, 0.0
          %v1177 = vmax.f32 %v1129, 0.0
          %v1178 = vmax.f32 %v1132, 0.0
          %v1179 = vmax.f32 %v1137, 0.0
          %v1180 = vmax.f32 %v1140, 0.0
          %v1181 = vmax.f32 %v1145, 0.0
          %v1182 = vmax.f32 %v1148, 0.0
          %1183 = vst [vmem:[%s259] sm:$0xff] %v1151
          %1184 = vst [vmem:[%s259 + $0x8] sm:$0xff] %v1152
          %1185 = vst [vmem:[%s259 + $0x10] sm:$0xff] %v1153
          %1186 = vst [vmem:[%s259 + $0x18] sm:$0xff] %v1154
          %1187 = vst [vmem:[%s259 + $0x20] sm:$0xff] %v1155
          %1188 = vst [vmem:[%s259 + $0x28] sm:$0xff] %v1156
          %1189 = vst [vmem:[%s259 + $0x30] sm:$0xff] %v1157
          %1190 = vst [vmem:[%s259 + $0x38] sm:$0xff] %v1158
          %1191 = vst [vmem:[%s259 + $0x40] sm:$0xff] %v1159
          %1192 = vst [vmem:[%s259 + $0x48] sm:$0xff] %v1160
          %1193 = vst [vmem:[%s259 + $0x50] sm:$0xff] %v1161
          %1194 = vst [vmem:[%s259 + $0x58] sm:$0xff] %v1162
          %1195 = vst [vmem:[%s259 + $0x60] sm:$0xff] %v1163
          %1196 = vst [vmem:[%s259 + $0x68] sm:$0xff] %v1164
          %1197 = vst [vmem:[%s259 + $0x70] sm:$0xff] %v1165
          %1198 = vst [vmem:[%s259 + $0x78] sm:$0xff] %v1166
          %1199 = vst [vmem:[%s259 + $0x80] sm:$0xff] %v1167
          %1200 = vst [vmem:[%s259 + $0x88] sm:$0xff] %v1168
          %1201 = vst [vmem:[%s259 + $0x90] sm:$0xff] %v1169
          %1202 = vst [vmem:[%s259 + $0x98] sm:$0xff] %v1170
          %1203 = vst [vmem:[%s259 + $0xa0] sm:$0xff] %v1171
          %1204 = vst [vmem:[%s259 + $0xa8] sm:$0xff] %v1172
          %1205 = vst [vmem:[%s259 + $0xb0] sm:$0xff] %v1173
          %1206 = vst [vmem:[%s259 + $0xb8] sm:$0xff] %v1174
          %1207 = vst [vmem:[%s259 + $0xc0] sm:$0xff] %v1175
          %1208 = vst [vmem:[%s259 + $0xc8] sm:$0xff] %v1176
          %1209 = vst [vmem:[%s259 + $0xd0] sm:$0xff] %v1177
          %1210 = vst [vmem:[%s259 + $0xd8] sm:$0xff] %v1178
          %1211 = vst [vmem:[%s259 + $0xe0] sm:$0xff] %v1179
          %1212 = vst [vmem:[%s259 + $0xe8] sm:$0xff] %v1180
          %1213 = vst [vmem:[%s259 + $0xf0] sm:$0xff] %v1181
          %1214 = vst [vmem:[%s259 + $0xf8] sm:$0xff] %v1182
        $region48: #{roi_2mlp_head_forward.1} parent=39 // pred_fallthru
          _
        %s1215 = sand.u32 %s156, 1
        %s1216 = scalar_lea.sflag [#allocation4], %s1215
        %s1217 = sand.u32 %s156, 1
        %s1218 = smul.addr %s1217, 256
        %s1219 = scalar_lea.vmem [#allocation3], %s1218
        // Predicated region
        $region49: #{roi_2mlp_head_forward.1} parent=39 // pred_check
          %p1220 = pneg %p166
        $region50: #{roi_2mlp_head_forward.1} parent=39 // pred_check_branch
          %1222 = sbr.rel (%p1220) target = $region52
        $region51: #{roi_2mlp_head_forward.1} parent=39 // pred_region
          %s1223 = smul.u32 32, %s23
          %s1225 = ssub.s32 4096, 4096
          %1226 = vsyncadd %s1216, %s1225
          %s1227 = smul.addr %s1223, 128
          %s1228 = scalar_lea.hbm %s5, %s1227
          %s1229 = sshll.u32 %s1219, 4
          %s1230 = int_to_ptr.vmem [resolvable:$true] %s1229
          %1235 = dma.vmem_to_hbm [thread:$0]  %s1230, 4096, %s1228, %s1216, 128, 128, 8
        $region52: #{roi_2mlp_head_forward.1} parent=39 // pred_fallthru
          _
      $region40: #{roi_2mlp_head_forward.1} parent=5 // pred_fallthru
        _
      %p1236 = scmp.le.s32.totalorder 2, %s14
      // Predicated region
      $region53: #{roi_2mlp_head_forward.1} parent=5 // pred_check
        %p1237 = pneg %p1236
      $region54: #{roi_2mlp_head_forward.1} parent=5 // pred_check_branch
        %1239 = sbr.rel (%p1237) target = $region56
      $region55: #{roi_2mlp_head_forward.1} parent=5 // pred_region
        %s1240 = ssub.s32 %s14, 2
        // Predicated region
        $region57: #{roi_2mlp_head_forward.1} parent=55 // pred_check
          %p1241 = pneg %p172
        $region58: #{roi_2mlp_head_forward.1} parent=55 // pred_check_branch
          %1243 = sbr.rel (%p1241) target = $region60
        $region59: #{roi_2mlp_head_forward.1} parent=55 // pred_region
          %s1244 = sand.u32 %s157, 1
          %s1245 = scalar_lea.sflag [#allocation4], %s1244
          %s1246 = sand.u32 %s157, 1
          %s1247 = smul.addr %s1246, 256
          %s1248 = scalar_lea.vmem [#allocation3], %s1247
          %1249 = dma.done %s1245, 4096
        $region60: #{roi_2mlp_head_forward.1} parent=55 // pred_fallthru
          _
      $region56: #{roi_2mlp_head_forward.1} parent=5 // pred_fallthru
        _
    $region6: #{roi_2mlp_head_forward.1} parent=1 // loop_footer
      %s18 = sadd.s32 1, %s14
    $region7: #{roi_2mlp_head_forward.1} parent=1 // loop_footer_branch
      %13 = sbr.rel target = $region3
    $region8: #{roi_2mlp_head_forward.1} parent=1 // loop_exit
      _
    %1250 = vsyncpa [#allocation4], 1
    %s1251 = scalar_lea.sflag [#allocation4], 1
    %1252 = vsyncpa %s1251, 1

</llo_original>
